<compile_context>
chip_gen: v6e
topology: v6e:2x2x1
jax: 0.10.0
libtpu: 0.0.40
codegen_flags: <defaults>
</compile_context>

<pallas_src>
import functools
import math

import jax
import jax.numpy as jnp
import numpy as np
from jax.experimental import pallas as pl
from jax.experimental.pallas import tpu as pltpu


# ----------------------------- kernel 1: projection -------------------------
def _proj_kernel(inp_ref, wext_ref, h_ref, hext_ref):
    # h_ext = inp @ [W | W@a1 | W@a2 | 0]  -> [TR, 128] in f32.
    h_ext = jnp.dot(inp_ref[...], wext_ref[...],
                    preferred_element_type=jnp.float32)
    hext_ref[...] = h_ext                      # f32 slab (f1/f2 sliced outside)
    h_ref[...] = h_ext.astype(h_ref.dtype)     # bf16 values for aggregation


# --------------------- kernel 2: flash-style masked GAT ---------------------
def _flash_gat_kernel(blk_ref, h_ref, f1_ref, f2_ref, he_ref, hmean_ref,
                      adj_ref, out_ref, m_ref, l_ref, acc_ref,
                      *, alpha, neg, tk, resident):
    qi = pl.program_id(0)
    ki = pl.program_id(1)

    @pl.when(ki == 0)
    def _():
        m_ref[...] = jnp.full(m_ref.shape, -jnp.inf, jnp.float32)
        l_ref[...] = jnp.zeros(l_ref.shape, jnp.float32)
        acc_ref[...] = jnp.zeros(acc_ref.shape, jnp.float32)

    # Skip tiles with no edges (incl. all padding tiles): masked entries would
    # contribute exactly 0 (exp underflow) anyway, so this is numerically exact.
    @pl.when(blk_ref[qi, ki] > 0)
    def _():
        if resident:
            # h is VMEM-resident; slice the current neighbor tile in place.
            k0 = pl.multiple_of(ki * tk, tk)
            hk = h_ref[pl.ds(k0, tk), :]
        else:
            hk = h_ref[...]

        # e[i, j] = LeakyReLU(f1[i] + f2[j]); mask with the int8 adjacency.
        e = f1_ref[...] + f2_ref[...]                 # (TQ,1)+(1,TK) -> (TQ,TK)
        e = jnp.where(e > 0, e, alpha * e)
        logits = jnp.where(adj_ref[...] > 0, e, neg)

        # Online softmax update over the neighbor axis.
        m_prev = m_ref[...]
        m_new = jnp.maximum(m_prev, jnp.max(logits, axis=1, keepdims=True))
        corr = jnp.exp(m_prev - m_new)
        p = jnp.exp(logits - m_new)
        l_ref[...] = corr * l_ref[...] + jnp.sum(p, axis=1, keepdims=True)
        acc_ref[...] = corr * acc_ref[...] + jnp.dot(
            p.astype(jnp.bfloat16), hk, preferred_element_type=jnp.float32)
        m_ref[...] = m_new

    @pl.when(ki == pl.num_programs(1) - 1)
    def _():
        l_safe = jnp.where(l_ref[...] > 0.0, l_ref[...], 1.0)
        h_prime = acc_ref[...] * pl.reciprocal(l_safe, approx=True)
        # Rows with no edges at all: reference softmax over all-(-1e12) logits
        # is uniform over the N real nodes -> mean of h (precomputed in f32).
        hm = jnp.broadcast_to(hmean_ref[...], h_prime.shape)
        h_prime = jnp.where(he_ref[...] > 0.0, h_prime, hm)
        out = jnp.where(h_prime > 0, h_prime, jnp.exp(h_prime) - 1.0)  # ELU
        out_ref[...] = out.astype(out_ref.dtype)


# --------------------------------- wrapper -----------------------------------
def gat_forward(input_feature, adj, W, a, *, alpha=0.2, tq=256, tk=512):
    """input_feature: [N, F_in], adj: [N, N] (nonzero = edge),
    W: [F_in, F_out], a: [2*F_out, 1]."""
    N, f_in = input_feature.shape
    f_out = W.shape[1]
    assert f_out + 2 <= 128, "F_out must fit the 128-lane slab with f1/f2"
    f_pad = 128                                    # lane-dense padded width
    unit = (tq * tk) // math.gcd(tq, tk)           # lcm(tq, tk)
    n_pad = ((N + unit - 1) // unit) * unit
    n_blk_q = n_pad // tq
    n_blk_k = n_pad // tk

    # Fold a1/a2 into the projection: one lane-dense matmul gives h, f1, f2.
    W = W.astype(jnp.float32)
    a1 = a[:f_out].astype(jnp.float32)
    a2 = a[f_out:].astype(jnp.float32)
    w_ext = jnp.concatenate(
        [W, W @ a1, W @ a2, jnp.zeros((f_in, f_pad - f_out - 2), jnp.float32)],
        axis=1)

    inp_p = jnp.pad(input_feature.astype(jnp.float32), ((0, n_pad - N), (0, 0)))
    adj_p = jnp.pad((adj > 0).astype(jnp.int8),
                    ((0, n_pad - N), (0, n_pad - N)))

    # ---- kernel 1: fused projection (lane-dense stores only) ---------------
    proj_tile = math.gcd(n_pad, 512)
    h_bf16, hext_f32 = pl.pallas_call(
        _proj_kernel,
        out_shape=(jax.ShapeDtypeStruct((n_pad, f_pad), jnp.bfloat16),
                   jax.ShapeDtypeStruct((n_pad, f_pad), jnp.float32)),
        grid_spec=pltpu.PrefetchScalarGridSpec(
            num_scalar_prefetch=0,
            grid=(n_pad // proj_tile,),
            in_specs=[pl.BlockSpec((proj_tile, f_in), lambda r: (r, 0)),
                      pl.BlockSpec((f_in, f_pad), lambda r: (0, 0))],
            out_specs=[pl.BlockSpec((proj_tile, f_pad), lambda r: (r, 0)),
                       pl.BlockSpec((proj_tile, f_pad), lambda r: (r, 0))]),
        compiler_params=pltpu.CompilerParams(
            dimension_semantics=("parallel",),
            vmem_limit_bytes=32 * 1024 * 1024),
    )(inp_p, w_ext)

    # Cheap O(N) layout plumbing outside the hot loop.
    f1_col = hext_f32[:, f_out:f_out + 1]            # [n_pad, 1]  f32
    f2_row = hext_f32[:, f_out + 1].reshape(1, n_pad)  # [1, n_pad] f32
    has_edge = (adj_p > 0).any(axis=1, keepdims=True).astype(jnp.float32)
    h_mean = jnp.sum(hext_f32, axis=0, keepdims=True) / float(N)  # [1, f_pad]
    block_map = (adj_p.reshape(n_blk_q, tq, n_blk_k, tk) > 0).any(
        axis=(1, 3)).astype(jnp.int32)               # [n_blk_q, n_blk_k] SMEM

    # ---- kernel 2: tiled masked-softmax attention + aggregation ------------
    h_bytes = n_pad * f_pad * 2
    # Residency budget kept conservative so it also fits v7x (64 MiB VMEM).
    resident = h_bytes <= 24 * 1024 * 1024
    if resident:
        h_spec = pl.BlockSpec((n_pad, f_pad), lambda qi, ki, bm: (0, 0))
    else:
        # TODO(synk): streaming fallback for very large N; consider
        # pipeline_mode=pl.Buffered(3) here if profiling shows exposed DMA.
        h_spec = pl.BlockSpec((tk, f_pad), lambda qi, ki, bm: (ki, 0))
    vmem_limit = int(min(48 * 2**20, max(32 * 2**20, h_bytes + 8 * 2**20)))

    out_pad = pl.pallas_call(
        functools.partial(_flash_gat_kernel, alpha=alpha, neg=-1.0e12,
                          tk=tk, resident=resident),
        out_shape=jax.ShapeDtypeStruct((n_pad, f_pad), jnp.float32),
        grid_spec=pltpu.PrefetchScalarGridSpec(
            num_scalar_prefetch=1,                     # block_map -> SMEM
            grid=(n_blk_q, n_blk_k),
            in_specs=[h_spec,                                              # h values
                      pl.BlockSpec((tq, 1), lambda qi, ki, bm: (qi, 0)),   # f1 (query)
                      pl.BlockSpec((1, tk), lambda qi, ki, bm: (0, ki)),   # f2 (neighbor)
                      pl.BlockSpec((tq, 1), lambda qi, ki, bm: (qi, 0)),   # has_edge
                      pl.BlockSpec((1, f_pad), lambda qi, ki, bm: (0, 0)),  # h_mean
                      pl.BlockSpec((tq, tk), lambda qi, ki, bm: (qi, ki))],  # adj int8
            out_specs=pl.BlockSpec((tq, f_pad), lambda qi, ki, bm: (qi, 0)),
            scratch_shapes=[pltpu.VMEM((tq, 1), jnp.float32),       # m
                            pltpu.VMEM((tq, 1), jnp.float32),       # l
                            pltpu.VMEM((tq, f_pad), jnp.float32)]),  # acc
        compiler_params=pltpu.CompilerParams(
            dimension_semantics=("parallel", "arbitrary"),
            vmem_limit_bytes=vmem_limit),
    )(block_map, h_bf16, f1_col, f2_row, has_edge, h_mean, adj_p)

    return out_pad[:N, :f_out]


# ------------------------------ test utilities -------------------------------
def xavier_uniform(key, shape, gain=1.414):
    fan_in, fan_out = shape[0], shape[1]
    bound = gain * np.sqrt(6.0 / (fan_in + fan_out))
    return jax.random.uniform(key, shape, jnp.float32, -bound, bound)


def gat_reference(input_feature, adj, W, a, alpha=0.2):
    """Pure-JAX f32 reference mirroring the PyTorch forward (eval-mode dropout)."""
    h = input_feature @ W
    f_out = W.shape[1]
    f1 = h @ a[:f_out]
    f2 = h @ a[f_out:]
    e = f1 + f2.T
    e = jnp.where(e > 0, e, alpha * e)
    logits = jnp.where(adj > 0, e, -1.0e12)
    attention = jax.nn.softmax(logits, axis=1)
    h_prime = attention @ h
    return jnp.where(h_prime > 0, h_prime, jnp.exp(h_prime) - 1.0)


if __name__ == "__main__":
    # Small shapes consistent with the module: N nodes, feature_length,
    # output_length. Large enough to exercise multiple query tiles and the
    # block-skip / padding / isolated-node paths.
    N = 256
    feature_length = 64
    output_length = 16

    key = jax.random.PRNGKey(0)
    k_x, k_adj, k_w, k_a = jax.random.split(key, 4)

    input_feature = jax.random.normal(k_x, (N, feature_length), jnp.float32)
    # Random 0/1 adjacency with self loops.
    adj = (jax.random.uniform(k_adj, (N, N)) > 0.7).astype(jnp.float32)
    adj = jnp.maximum(adj, jnp.eye(N, dtype=jnp.float32))
    # Two fully isolated nodes (no edges, no self loop) to exercise the
    # reference's uniform-attention fallback.
    adj = adj.at[3, :].set(0.0)
    adj = adj.at[100, :].set(0.0)

    W = xavier_uniform(k_w, (feature_length, output_length))
    a = xavier_uniform(k_a, (2 * output_length, 1))

    out = jax.block_until_ready(gat_forward(input_feature, adj, W, a))

    ref = gat_reference(input_feature, adj, W, a)
    # bf16 value path (attention probs and h) on the MXU; softmax logits and
    # the isolated-node fallback stay f32, so ~1e-2 agreement is expected.
    np.testing.assert_allclose(np.asarray(out), np.asarray(ref),
                               rtol=2e-2, atol=2e-2)

    print("KERNEL_OK")
</pallas_src>

<mosaic_0001>
module attributes {stable_mosaic.version = 11 : i64} {
  func.func @_proj_kernel(%arg0: i32, %arg1: memref<512x64xf32, #tpu.memory_space<vmem>>, %arg2: memref<64x128xf32, #tpu.memory_space<vmem>>, %arg3: memref<512x128xbf16, #tpu.memory_space<vmem>>, %arg4: memref<512x128xf32, #tpu.memory_space<vmem>>) attributes {dimension_semantics = [#tpu.dimension_semantics<parallel>], iteration_bounds = array<i64: 1>, scalar_prefetch = 0 : i64, scratch_operands = 0 : i64, tpu.core_type = #tpu.core_type<tc>, window_params = [{transform_indices = @transform_0, window_bounds = array<i64: 512, 64>}, {pipeline_mode = #tpu.pipeline_mode<synchronous>, transform_indices = @transform_1, window_bounds = array<i64: 64, 128>}, {transform_indices = @transform_2, window_bounds = array<i64: 512, 128>}, {transform_indices = @transform_3, window_bounds = array<i64: 512, 128>}]} {
    %c0 = arith.constant 0 : index
    %c0_0 = arith.constant 0 : index
    %0 = vector.load %arg1[%c0, %c0_0] : memref<512x64xf32, #tpu.memory_space<vmem>>, vector<512x64xf32>
    %c0_1 = arith.constant 0 : index
    %c0_2 = arith.constant 0 : index
    %1 = vector.load %arg2[%c0_1, %c0_2] : memref<64x128xf32, #tpu.memory_space<vmem>>, vector<64x128xf32>
    %cst = arith.constant dense<0.000000e+00> : vector<512x128xf32>
    %2 = tpu.matmul %0, %1, %cst {dimension_numbers = #tpu.dot_dimension_numbers<[1], [0], [0], [1], [0, 0, 1, 1], [], []>} : vector<512x64xf32>, vector<64x128xf32>, vector<512x128xf32> -> vector<512x128xf32>
    %c0_3 = arith.constant 0 : index
    %c0_4 = arith.constant 0 : index
    %3 = vector.load %arg4[%c0_3, %c0_4] : memref<512x128xf32, #tpu.memory_space<vmem>>, vector<512x128xf32>
    tpu.vector_store %arg4[%c0_3, %c0_4], %2 {strides = array<i32>} : memref<512x128xf32, #tpu.memory_space<vmem>>, vector<512x128xf32>,
    %4 = arith.truncf %2 : vector<512x128xf32> to vector<512x128xbf16>
    %c0_5 = arith.constant 0 : index
    %c0_6 = arith.constant 0 : index
    %5 = vector.load %arg3[%c0_5, %c0_6] : memref<512x128xbf16, #tpu.memory_space<vmem>>, vector<512x128xbf16>
    tpu.vector_store %arg3[%c0_5, %c0_6], %4 {strides = array<i32>} : memref<512x128xbf16, #tpu.memory_space<vmem>>, vector<512x128xbf16>,
    return
  }
  func.func @transform_0(%arg0: i32) -> (i32, i32) {
    %c0_i32 = arith.constant 0 : i32
    %c0_i32_0 = arith.constant 0 : i32
    return %arg0, %c0_i32 : i32, i32
  }
  func.func @transform_1(%arg0: i32) -> (i32, i32) {
    %c0_i32 = arith.constant 0 : i32
    %c0_i32_0 = arith.constant 0 : i32
    %c0_i32_1 = arith.constant 0 : i32
    return %c0_i32, %c0_i32_0 : i32, i32
  }
  func.func @transform_2(%arg0: i32) -> (i32, i32) {
    %c0_i32 = arith.constant 0 : i32
    %c0_i32_0 = arith.constant 0 : i32
    return %arg0, %c0_i32 : i32, i32
  }
  func.func @transform_3(%arg0: i32) -> (i32, i32) {
    %c0_i32 = arith.constant 0 : i32
    %c0_i32_0 = arith.constant 0 : i32
    return %arg0, %c0_i32 : i32, i32
  }
}

</mosaic_0001>

<llo_original>
// kernel: tpu_custom_call.1
$region0: #{tpu_custom_call.1}
  #allocation0 [shape = 'u32[]', space=smem, size = 0x4, offset = 0x4, fixed_abs, tag = 'smem constant byte address 0x4 - core index']
  #allocation1 [shape = 'u32[144,128]{1,0:T(1,128)}', space=vmem, size = 0x12000, scoped, tag = 'internal scratch']
  %s0 = inlined_call_operand.vmem [shape: f32[512,64], index: 0, kind: input, shape index: {}]
  %s1 = inlined_call_operand.vmem [shape: f32[64,128], index: 1, kind: input, shape index: {}]
  %s2 = inlined_call_operand.hbm [shape: bf16[512,128], index: 2, kind: output, shape index: {0}]
  %s3 = inlined_call_operand.hbm [shape: f32[512,128], index: 3, kind: output, shape index: {1}]
  %4 = xla_tuple %s2, %s3
  %s5 = sld [smem:[#allocation0]]
  $region26: #{tpu_custom_call.1} parent=0
    _
  %s7 = ssub.s32 1, %s5
  %s8 = scalar_select 0, %s7, %s5
  $region1: #{tpu_custom_call.1} parent=0
    #allocation2 [shape = 'u8[131072]{0}', space=vmem, size = 0x20000, scoped, tag = 'output window, operand 0, single buffered']
    #allocation3 [shape = 's32[1]{0}', space=sflag, size = 0x4, scoped, tag = 'scoped memory for tpu_custom_call.1']
    #allocation4 [shape = 'u8[262144]{0}', space=vmem, size = 0x40000, scoped, tag = 'output window, operand 1, single buffered']
    #allocation5 [shape = 's32[1]{0}', space=sflag, size = 0x4, scoped, tag = 'scoped memory for tpu_custom_call.1']
    %9 = vsyncpa [#allocation3], 0
    %10 = vsyncpa [#allocation5], 0
    // Predicated region
    $region2: #{tpu_custom_call.1} parent=1 // pred_check
      _
    $region3: #{tpu_custom_call.1} parent=1 // pred_check_branch
      %12 = sbr.rel (0) target = $region5
    $region4: #{tpu_custom_call.1} parent=1 // pred_region
      _
    $region5: #{tpu_custom_call.1} parent=1 // pred_fallthru
      _
    // Predicated region
    $region6: #{tpu_custom_call.1} parent=1 // pred_check
      _
    $region7: #{tpu_custom_call.1} parent=1 // pred_check_branch
      %14 = sbr.rel (0) target = $region9
    $region8: #{tpu_custom_call.1} parent=1 // pred_region
      _
    $region9: #{tpu_custom_call.1} parent=1 // pred_fallthru
      _
    %v15 = vld [vmem:[%s0] sm:$0xff]
    %v16 = vld [vmem:[%s0 + $0x8] sm:$0xff]
    %v17 = vld [vmem:[%s0 + $0x10] sm:$0xff]
    %v18 = vld [vmem:[%s0 + $0x18] sm:$0xff]
    %v19 = vld [vmem:[%s0 + $0x20] sm:$0xff]
    %v20 = vld [vmem:[%s0 + $0x28] sm:$0xff]
    %v21 = vld [vmem:[%s0 + $0x30] sm:$0xff]
    %v22 = vld [vmem:[%s0 + $0x38] sm:$0xff]
    %v23 = vld [vmem:[%s0 + $0x40] sm:$0xff]
    %v24 = vld [vmem:[%s0 + $0x48] sm:$0xff]
    %v25 = vld [vmem:[%s0 + $0x50] sm:$0xff]
    %v26 = vld [vmem:[%s0 + $0x58] sm:$0xff]
    %v27 = vld [vmem:[%s0 + $0x60] sm:$0xff]
    %v28 = vld [vmem:[%s0 + $0x68] sm:$0xff]
    %v29 = vld [vmem:[%s0 + $0x70] sm:$0xff]
    %v30 = vld [vmem:[%s0 + $0x78] sm:$0xff]
    %v31 = vld [vmem:[%s0 + $0x80] sm:$0xff]
    %v32 = vld [vmem:[%s0 + $0x88] sm:$0xff]
    %v33 = vld [vmem:[%s0 + $0x90] sm:$0xff]
    %v34 = vld [vmem:[%s0 + $0x98] sm:$0xff]
    %v35 = vld [vmem:[%s0 + $0xa0] sm:$0xff]
    %v36 = vld [vmem:[%s0 + $0xa8] sm:$0xff]
    %v37 = vld [vmem:[%s0 + $0xb0] sm:$0xff]
    %v38 = vld [vmem:[%s0 + $0xb8] sm:$0xff]
    %v39 = vld [vmem:[%s0 + $0xc0] sm:$0xff]
    %v40 = vld [vmem:[%s0 + $0xc8] sm:$0xff]
    %v41 = vld [vmem:[%s0 + $0xd0] sm:$0xff]
    %v42 = vld [vmem:[%s0 + $0xd8] sm:$0xff]
    %v43 = vld [vmem:[%s0 + $0xe0] sm:$0xff]
    %v44 = vld [vmem:[%s0 + $0xe8] sm:$0xff]
    %v45 = vld [vmem:[%s0 + $0xf0] sm:$0xff]
    %v46 = vld [vmem:[%s0 + $0xf8] sm:$0xff]
    %v47 = vld [vmem:[%s0 + $0x100] sm:$0xff]
    %v48 = vld [vmem:[%s0 + $0x108] sm:$0xff]
    %v49 = vld [vmem:[%s0 + $0x110] sm:$0xff]
    %v50 = vld [vmem:[%s0 + $0x118] sm:$0xff]
    %v51 = vld [vmem:[%s0 + $0x120] sm:$0xff]
    %v52 = vld [vmem:[%s0 + $0x128] sm:$0xff]
    %v53 = vld [vmem:[%s0 + $0x130] sm:$0xff]
    %v54 = vld [vmem:[%s0 + $0x138] sm:$0xff]
    %v55 = vld [vmem:[%s0 + $0x140] sm:$0xff]
    %v56 = vld [vmem:[%s0 + $0x148] sm:$0xff]
    %v57 = vld [vmem:[%s0 + $0x150] sm:$0xff]
    %v58 = vld [vmem:[%s0 + $0x158] sm:$0xff]
    %v59 = vld [vmem:[%s0 + $0x160] sm:$0xff]
    %v60 = vld [vmem:[%s0 + $0x168] sm:$0xff]
    %v61 = vld [vmem:[%s0 + $0x170] sm:$0xff]
    %v62 = vld [vmem:[%s0 + $0x178] sm:$0xff]
    %v63 = vld [vmem:[%s0 + $0x180] sm:$0xff]
    %v64 = vld [vmem:[%s0 + $0x188] sm:$0xff]
    %v65 = vld [vmem:[%s0 + $0x190] sm:$0xff]
    %v66 = vld [vmem:[%s0 + $0x198] sm:$0xff]
    %v67 = vld [vmem:[%s0 + $0x1a0] sm:$0xff]
    %v68 = vld [vmem:[%s0 + $0x1a8] sm:$0xff]
    %v69 = vld [vmem:[%s0 + $0x1b0] sm:$0xff]
    %v70 = vld [vmem:[%s0 + $0x1b8] sm:$0xff]
    %v71 = vld [vmem:[%s0 + $0x1c0] sm:$0xff]
    %v72 = vld [vmem:[%s0 + $0x1c8] sm:$0xff]
    %v73 = vld [vmem:[%s0 + $0x1d0] sm:$0xff]
    %v74 = vld [vmem:[%s0 + $0x1d8] sm:$0xff]
    %v75 = vld [vmem:[%s0 + $0x1e0] sm:$0xff]
    %v76 = vld [vmem:[%s0 + $0x1e8] sm:$0xff]
    %v77 = vld [vmem:[%s0 + $0x1f0] sm:$0xff]
    %v78 = vld [vmem:[%s0 + $0x1f8] sm:$0xff]
    %v79 = vld [vmem:[%s1] sm:$0xff]
    %v80 = vld [vmem:[%s1 + $0x8] sm:$0xff]
    %v81 = vld [vmem:[%s1 + $0x10] sm:$0xff]
    %v82 = vld [vmem:[%s1 + $0x18] sm:$0xff]
    %v83 = vld [vmem:[%s1 + $0x20] sm:$0xff]
    %v84 = vld [vmem:[%s1 + $0x28] sm:$0xff]
    %v85 = vld [vmem:[%s1 + $0x30] sm:$0xff]
    %v86 = vld [vmem:[%s1 + $0x38] sm:$0xff]
    %vm87 = vcmask 523264
    %v89 = vsel %vm87, %v15, 0
    %v92 = vsel %vm87, %v16, 0
    %v95 = vsel %vm87, %v17, 0
    %v98 = vsel %vm87, %v18, 0
    %v101 = vsel %vm87, %v19, 0
    %v104 = vsel %vm87, %v20, 0
    %v107 = vsel %vm87, %v21, 0
    %v110 = vsel %vm87, %v22, 0
    %v113 = vsel %vm87, %v23, 0
    %v116 = vsel %vm87, %v24, 0
    %v119 = vsel %vm87, %v25, 0
    %v122 = vsel %vm87, %v26, 0
    %v125 = vsel %vm87, %v27, 0
    %v128 = vsel %vm87, %v28, 0
    %v131 = vsel %vm87, %v29, 0
    %v134 = vsel %vm87, %v30, 0
    %v137 = vsel %vm87, %v31, 0
    %v140 = vsel %vm87, %v32, 0
    %v143 = vsel %vm87, %v33, 0
    %v146 = vsel %vm87, %v34, 0
    %v149 = vsel %vm87, %v35, 0
    %v152 = vsel %vm87, %v36, 0
    %v155 = vsel %vm87, %v37, 0
    %v158 = vsel %vm87, %v38, 0
    %v161 = vsel %vm87, %v39, 0
    %v164 = vsel %vm87, %v40, 0
    %v167 = vsel %vm87, %v41, 0
    %v170 = vsel %vm87, %v42, 0
    %v173 = vsel %vm87, %v43, 0
    %v176 = vsel %vm87, %v44, 0
    %v179 = vsel %vm87, %v45, 0
    %v182 = vsel %vm87, %v46, 0
    %v185 = vsel %vm87, %v47, 0
    %v188 = vsel %vm87, %v48, 0
    %v191 = vsel %vm87, %v49, 0
    %v194 = vsel %vm87, %v50, 0
    %v197 = vsel %vm87, %v51, 0
    %v200 = vsel %vm87, %v52, 0
    %v203 = vsel %vm87, %v53, 0
    %v206 = vsel %vm87, %v54, 0
    %v209 = vsel %vm87, %v55, 0
    %v212 = vsel %vm87, %v56, 0
    %v215 = vsel %vm87, %v57, 0
    %v218 = vsel %vm87, %v58, 0
    %v221 = vsel %vm87, %v59, 0
    %v224 = vsel %vm87, %v60, 0
    %v227 = vsel %vm87, %v61, 0
    %v230 = vsel %vm87, %v62, 0
    %v233 = vsel %vm87, %v63, 0
    %v236 = vsel %vm87, %v64, 0
    %v239 = vsel %vm87, %v65, 0
    %v242 = vsel %vm87, %v66, 0
    %v245 = vsel %vm87, %v67, 0
    %v248 = vsel %vm87, %v68, 0
    %v251 = vsel %vm87, %v69, 0
    %v254 = vsel %vm87, %v70, 0
    %v257 = vsel %vm87, %v71, 0
    %v260 = vsel %vm87, %v72, 0
    %v263 = vsel %vm87, %v73, 0
    %v266 = vsel %vm87, %v74, 0
    %v269 = vsel %vm87, %v75, 0
    %v272 = vsel %vm87, %v76, 0
    %v275 = vsel %vm87, %v77, 0
    %v278 = vsel %vm87, %v78, 0
    %280 = vmatprep.subr.mxu0 0.0
    %281 = vmatpush1.msra.mxu0 0.0
    %282 = vmatprep.subr.mxu0 0.0
    %283 = vmatpush1.msra.mxu0 0.0
    %284 = vmatprep.subr.mxu0 0.0
    %285 = vmatpush1.msra.mxu0 0.0
    %286 = vmatprep.subr.mxu0 0.0
    %287 = vmatpush1.msra.mxu0 0.0
    %288 = vmatprep.subr.mxu0 0.0
    %289 = vmatpush1.msra.mxu0 0.0
    %290 = vmatprep.subr.mxu0 0.0
    %291 = vmatpush1.msra.mxu0 0.0
    %292 = vmatprep.subr.mxu0 0.0
    %293 = vmatpush1.msra.mxu0 0.0
    %294 = vmatprep.subr.mxu0 0.0
    %295 = vmatpush1.msra.mxu0 0.0
    %296 = vmatprep.subr.mxu0 0.0
    %297 = vmatpush1.msra.mxu0 %v86
    %298 = vmatprep.subr.mxu0 0.0
    %299 = vmatpush1.msra.mxu0 %v85
    %300 = vmatprep.subr.mxu0 0.0
    %301 = vmatpush1.msra.mxu0 %v84
    %302 = vmatprep.subr.mxu0 0.0
    %303 = vmatpush1.msra.mxu0 %v83
    %304 = vmatprep.subr.mxu0 0.0
    %305 = vmatpush1.msra.mxu0 %v82
    %306 = vmatprep.subr.mxu0 0.0
    %307 = vmatpush1.msra.mxu0 %v81
    %308 = vmatprep.subr.mxu0 0.0
    %309 = vmatpush1.msra.mxu0 %v80
    %310 = vmatprep.subr.mxu0 0.0
    %311 = vmatpush1.msra.mxu0 %v79
    %312 = vmatprep.subr.mxu0 0.0
    %313 = vmatpush2.msra.mxu0 0.0
    %314 = vmatprep.subr.mxu0 0.0
    %315 = vmatpush2.msra.mxu0 0.0
    %316 = vmatprep.subr.mxu0 0.0
    %317 = vmatpush2.msra.mxu0 0.0
    %318 = vmatprep.subr.mxu0 0.0
    %319 = vmatpush2.msra.mxu0 0.0
    %320 = vmatprep.subr.mxu0 0.0
    %321 = vmatpush2.msra.mxu0 0.0
    %322 = vmatprep.subr.mxu0 0.0
    %323 = vmatpush2.msra.mxu0 0.0
    %324 = vmatprep.subr.mxu0 0.0
    %325 = vmatpush2.msra.mxu0 0.0
    %326 = vmatprep.subr.mxu0 0.0
    %327 = vmatpush2.msra.mxu0 0.0
    %328 = vmatprep.subr.mxu0 0.0
    %329 = vmatpush2.msra.mxu0 0.0
    %330 = vmatprep.subr.mxu0 0.0
    %331 = vmatpush2.msra.mxu0 0.0
    %332 = vmatprep.subr.mxu0 0.0
    %333 = vmatpush2.msra.mxu0 0.0
    %334 = vmatprep.subr.mxu0 0.0
    %335 = vmatpush2.msra.mxu0 0.0
    %336 = vmatprep.subr.mxu0 0.0
    %337 = vmatpush2.msra.mxu0 0.0
    %338 = vmatprep.subr.mxu0 0.0
    %339 = vmatpush2.msra.mxu0 0.0
    %340 = vmatprep.subr.mxu0 0.0
    %341 = vmatpush2.msra.mxu0 0.0
    %342 = vmatprep.subr.mxu0 0.0
    %343 = vmatpush2.msra.mxu0 0.0
    %344 = vmatprep.mubr.f32.mxu0 0.0
    %345 = vmatmul.mubr.f32.gmra.mxu0 %v89
    %v346 = vpop.f32.mrf.mxu0
    %v347 = vadd.f32 0.0, %v346
    %v348 = vpop.f32.mrf.mxu0
    %349 = vmatprep.mubr.f32.mxu0 0.0
    %350 = vmatmul.mubr.f32.gmra.mxu0 %v92
    %v351 = vpop.f32.mrf.mxu0
    %v352 = vadd.f32 0.0, %v351
    %v353 = vpop.f32.mrf.mxu0
    %354 = vmatprep.mubr.f32.mxu0 0.0
    %355 = vmatmul.mubr.f32.gmra.mxu0 %v95
    %v356 = vpop.f32.mrf.mxu0
    %v357 = vadd.f32 0.0, %v356
    %v358 = vpop.f32.mrf.mxu0
    %359 = vmatprep.mubr.f32.mxu0 0.0
    %360 = vmatmul.mubr.f32.gmra.mxu0 %v98
    %v361 = vpop.f32.mrf.mxu0
    %v362 = vadd.f32 0.0, %v361
    %v363 = vpop.f32.mrf.mxu0
    %364 = vmatprep.mubr.f32.mxu0 0.0
    %365 = vmatmul.mubr.f32.gmra.mxu0 %v101
    %v366 = vpop.f32.mrf.mxu0
    %v367 = vadd.f32 0.0, %v366
    %v368 = vpop.f32.mrf.mxu0
    %369 = vmatprep.mubr.f32.mxu0 0.0
    %370 = vmatmul.mubr.f32.gmra.mxu0 %v104
    %v371 = vpop.f32.mrf.mxu0
    %v372 = vadd.f32 0.0, %v371
    %v373 = vpop.f32.mrf.mxu0
    %374 = vmatprep.mubr.f32.mxu0 0.0
    %375 = vmatmul.mubr.f32.gmra.mxu0 %v107
    %v376 = vpop.f32.mrf.mxu0
    %v377 = vadd.f32 0.0, %v376
    %v378 = vpop.f32.mrf.mxu0
    %379 = vmatprep.mubr.f32.mxu0 0.0
    %380 = vmatmul.mubr.f32.gmra.mxu0 %v110
    %v381 = vpop.f32.mrf.mxu0
    %v382 = vadd.f32 0.0, %v381
    %v383 = vpop.f32.mrf.mxu0
    %384 = vmatprep.mubr.f32.mxu0 0.0
    %385 = vmatmul.mubr.f32.gmra.mxu0 %v113
    %v386 = vpop.f32.mrf.mxu0
    %v387 = vadd.f32 0.0, %v386
    %v388 = vpop.f32.mrf.mxu0
    %389 = vmatprep.mubr.f32.mxu0 0.0
    %390 = vmatmul.mubr.f32.gmra.mxu0 %v116
    %v391 = vpop.f32.mrf.mxu0
    %v392 = vadd.f32 0.0, %v391
    %v393 = vpop.f32.mrf.mxu0
    %394 = vmatprep.mubr.f32.mxu0 0.0
    %395 = vmatmul.mubr.f32.gmra.mxu0 %v119
    %v396 = vpop.f32.mrf.mxu0
    %v397 = vadd.f32 0.0, %v396
    %v398 = vpop.f32.mrf.mxu0
    %399 = vmatprep.mubr.f32.mxu0 0.0
    %400 = vmatmul.mubr.f32.gmra.mxu0 %v122
    %v401 = vpop.f32.mrf.mxu0
    %v402 = vadd.f32 0.0, %v401
    %v403 = vpop.f32.mrf.mxu0
    %404 = vmatprep.mubr.f32.mxu0 0.0
    %405 = vmatmul.mubr.f32.gmra.mxu0 %v125
    %v406 = vpop.f32.mrf.mxu0
    %v407 = vadd.f32 0.0, %v406
    %v408 = vpop.f32.mrf.mxu0
    %409 = vmatprep.mubr.f32.mxu0 0.0
    %410 = vmatmul.mubr.f32.gmra.mxu0 %v128
    %v411 = vpop.f32.mrf.mxu0
    %v412 = vadd.f32 0.0, %v411
    %v413 = vpop.f32.mrf.mxu0
    %414 = vmatprep.mubr.f32.mxu0 0.0
    %415 = vmatmul.mubr.f32.gmra.mxu0 %v131
    %v416 = vpop.f32.mrf.mxu0
    %v417 = vadd.f32 0.0, %v416
    %v418 = vpop.f32.mrf.mxu0
    %419 = vmatprep.mubr.f32.mxu0 0.0
    %420 = vmatmul.mubr.f32.gmra.mxu0 %v134
    %v421 = vpop.f32.mrf.mxu0
    %v422 = vadd.f32 0.0, %v421
    %v423 = vpop.f32.mrf.mxu0
    %424 = vmatprep.mubr.f32.mxu0 0.0
    %425 = vmatmul.mubr.f32.gmra.mxu0 %v137
    %v426 = vpop.f32.mrf.mxu0
    %v427 = vadd.f32 0.0, %v426
    %v428 = vpop.f32.mrf.mxu0
    %429 = vmatprep.mubr.f32.mxu0 0.0
    %430 = vmatmul.mubr.f32.gmra.mxu0 %v140
    %v431 = vpop.f32.mrf.mxu0
    %v432 = vadd.f32 0.0, %v431
    %v433 = vpop.f32.mrf.mxu0
    %434 = vmatprep.mubr.f32.mxu0 0.0
    %435 = vmatmul.mubr.f32.gmra.mxu0 %v143
    %v436 = vpop.f32.mrf.mxu0
    %v437 = vadd.f32 0.0, %v436
    %v438 = vpop.f32.mrf.mxu0
    %439 = vmatprep.mubr.f32.mxu0 0.0
    %440 = vmatmul.mubr.f32.gmra.mxu0 %v146
    %v441 = vpop.f32.mrf.mxu0
    %v442 = vadd.f32 0.0, %v441
    %v443 = vpop.f32.mrf.mxu0
    %444 = vmatprep.mubr.f32.mxu0 0.0
    %445 = vmatmul.mubr.f32.gmra.mxu0 %v149
    %v446 = vpop.f32.mrf.mxu0
    %v447 = vadd.f32 0.0, %v446
    %v448 = vpop.f32.mrf.mxu0
    %449 = vmatprep.mubr.f32.mxu0 0.0
    %450 = vmatmul.mubr.f32.gmra.mxu0 %v152
    %v451 = vpop.f32.mrf.mxu0
    %v452 = vadd.f32 0.0, %v451
    %v453 = vpop.f32.mrf.mxu0
    %454 = vmatprep.mubr.f32.mxu0 0.0
    %455 = vmatmul.mubr.f32.gmra.mxu0 %v155
    %v456 = vpop.f32.mrf.mxu0
    %v457 = vadd.f32 0.0, %v456
    %v458 = vpop.f32.mrf.mxu0
    %459 = vmatprep.mubr.f32.mxu0 0.0
    %460 = vmatmul.mubr.f32.gmra.mxu0 %v158
    %v461 = vpop.f32.mrf.mxu0
    %v462 = vadd.f32 0.0, %v461
    %v463 = vpop.f32.mrf.mxu0
    %464 = vmatprep.mubr.f32.mxu0 0.0
    %465 = vmatmul.mubr.f32.gmra.mxu0 %v161
    %v466 = vpop.f32.mrf.mxu0
    %v467 = vadd.f32 0.0, %v466
    %v468 = vpop.f32.mrf.mxu0
    %469 = vmatprep.mubr.f32.mxu0 0.0
    %470 = vmatmul.mubr.f32.gmra.mxu0 %v164
    %v471 = vpop.f32.mrf.mxu0
    %v472 = vadd.f32 0.0, %v471
    %v473 = vpop.f32.mrf.mxu0
    %474 = vmatprep.mubr.f32.mxu0 0.0
    %475 = vmatmul.mubr.f32.gmra.mxu0 %v167
    %v476 = vpop.f32.mrf.mxu0
    %v477 = vadd.f32 0.0, %v476
    %v478 = vpop.f32.mrf.mxu0
    %479 = vmatprep.mubr.f32.mxu0 0.0
    %480 = vmatmul.mubr.f32.gmra.mxu0 %v170
    %v481 = vpop.f32.mrf.mxu0
    %v482 = vadd.f32 0.0, %v481
    %v483 = vpop.f32.mrf.mxu0
    %484 = vmatprep.mubr.f32.mxu0 0.0
    %485 = vmatmul.mubr.f32.gmra.mxu0 %v173
    %v486 = vpop.f32.mrf.mxu0
    %v487 = vadd.f32 0.0, %v486
    %v488 = vpop.f32.mrf.mxu0
    %489 = vmatprep.mubr.f32.mxu0 0.0
    %490 = vmatmul.mubr.f32.gmra.mxu0 %v176
    %v491 = vpop.f32.mrf.mxu0
    %v492 = vadd.f32 0.0, %v491
    %v493 = vpop.f32.mrf.mxu0
    %494 = vmatprep.mubr.f32.mxu0 0.0
    %495 = vmatmul.mubr.f32.gmra.mxu0 %v179
    %v496 = vpop.f32.mrf.mxu0
    %v497 = vadd.f32 0.0, %v496
    %v498 = vpop.f32.mrf.mxu0
    %499 = vmatprep.mubr.f32.mxu0 0.0
    %500 = vmatmul.mubr.f32.gmra.mxu0 %v182
    %v501 = vpop.f32.mrf.mxu0
    %v502 = vadd.f32 0.0, %v501
    %v503 = vpop.f32.mrf.mxu0
    %504 = vmatprep.mubr.f32.mxu0 0.0
    %505 = vmatmul.mubr.f32.gmra.mxu0 %v185
    %v506 = vpop.f32.mrf.mxu0
    %v507 = vadd.f32 0.0, %v506
    %v508 = vpop.f32.mrf.mxu0
    %509 = vmatprep.mubr.f32.mxu0 0.0
    %510 = vmatmul.mubr.f32.gmra.mxu0 %v188
    %v511 = vpop.f32.mrf.mxu0
    %v512 = vadd.f32 0.0, %v511
    %v513 = vpop.f32.mrf.mxu0
    %514 = vmatprep.mubr.f32.mxu0 0.0
    %515 = vmatmul.mubr.f32.gmra.mxu0 %v191
    %v516 = vpop.f32.mrf.mxu0
    %v517 = vadd.f32 0.0, %v516
    %v518 = vpop.f32.mrf.mxu0
    %519 = vmatprep.mubr.f32.mxu0 0.0
    %520 = vmatmul.mubr.f32.gmra.mxu0 %v194
    %v521 = vpop.f32.mrf.mxu0
    %v522 = vadd.f32 0.0, %v521
    %v523 = vpop.f32.mrf.mxu0
    %524 = vmatprep.mubr.f32.mxu0 0.0
    %525 = vmatmul.mubr.f32.gmra.mxu0 %v197
    %v526 = vpop.f32.mrf.mxu0
    %v527 = vadd.f32 0.0, %v526
    %v528 = vpop.f32.mrf.mxu0
    %529 = vmatprep.mubr.f32.mxu0 0.0
    %530 = vmatmul.mubr.f32.gmra.mxu0 %v200
    %v531 = vpop.f32.mrf.mxu0
    %v532 = vadd.f32 0.0, %v531
    %v533 = vpop.f32.mrf.mxu0
    %534 = vmatprep.mubr.f32.mxu0 0.0
    %535 = vmatmul.mubr.f32.gmra.mxu0 %v203
    %v536 = vpop.f32.mrf.mxu0
    %v537 = vadd.f32 0.0, %v536
    %v538 = vpop.f32.mrf.mxu0
    %539 = vmatprep.mubr.f32.mxu0 0.0
    %540 = vmatmul.mubr.f32.gmra.mxu0 %v206
    %v541 = vpop.f32.mrf.mxu0
    %v542 = vadd.f32 0.0, %v541
    %v543 = vpop.f32.mrf.mxu0
    %544 = vmatprep.mubr.f32.mxu0 0.0
    %545 = vmatmul.mubr.f32.gmra.mxu0 %v209
    %v546 = vpop.f32.mrf.mxu0
    %v547 = vadd.f32 0.0, %v546
    %v548 = vpop.f32.mrf.mxu0
    %549 = vmatprep.mubr.f32.mxu0 0.0
    %550 = vmatmul.mubr.f32.gmra.mxu0 %v212
    %v551 = vpop.f32.mrf.mxu0
    %v552 = vadd.f32 0.0, %v551
    %v553 = vpop.f32.mrf.mxu0
    %554 = vmatprep.mubr.f32.mxu0 0.0
    %555 = vmatmul.mubr.f32.gmra.mxu0 %v215
    %v556 = vpop.f32.mrf.mxu0
    %v557 = vadd.f32 0.0, %v556
    %v558 = vpop.f32.mrf.mxu0
    %559 = vmatprep.mubr.f32.mxu0 0.0
    %560 = vmatmul.mubr.f32.gmra.mxu0 %v218
    %v561 = vpop.f32.mrf.mxu0
    %v562 = vadd.f32 0.0, %v561
    %v563 = vpop.f32.mrf.mxu0
    %564 = vmatprep.mubr.f32.mxu0 0.0
    %565 = vmatmul.mubr.f32.gmra.mxu0 %v221
    %v566 = vpop.f32.mrf.mxu0
    %v567 = vadd.f32 0.0, %v566
    %v568 = vpop.f32.mrf.mxu0
    %569 = vmatprep.mubr.f32.mxu0 0.0
    %570 = vmatmul.mubr.f32.gmra.mxu0 %v224
    %v571 = vpop.f32.mrf.mxu0
    %v572 = vadd.f32 0.0, %v571
    %v573 = vpop.f32.mrf.mxu0
    %574 = vmatprep.mubr.f32.mxu0 0.0
    %575 = vmatmul.mubr.f32.gmra.mxu0 %v227
    %v576 = vpop.f32.mrf.mxu0
    %v577 = vadd.f32 0.0, %v576
    %v578 = vpop.f32.mrf.mxu0
    %579 = vmatprep.mubr.f32.mxu0 0.0
    %580 = vmatmul.mubr.f32.gmra.mxu0 %v230
    %v581 = vpop.f32.mrf.mxu0
    %v582 = vadd.f32 0.0, %v581
    %v583 = vpop.f32.mrf.mxu0
    %584 = vmatprep.mubr.f32.mxu0 0.0
    %585 = vmatmul.mubr.f32.gmra.mxu0 %v233
    %v586 = vpop.f32.mrf.mxu0
    %v587 = vadd.f32 0.0, %v586
    %v588 = vpop.f32.mrf.mxu0
    %589 = vmatprep.mubr.f32.mxu0 0.0
    %590 = vmatmul.mubr.f32.gmra.mxu0 %v236
    %v591 = vpop.f32.mrf.mxu0
    %v592 = vadd.f32 0.0, %v591
    %v593 = vpop.f32.mrf.mxu0
    %594 = vmatprep.mubr.f32.mxu0 0.0
    %595 = vmatmul.mubr.f32.gmra.mxu0 %v239
    %v596 = vpop.f32.mrf.mxu0
    %v597 = vadd.f32 0.0, %v596
    %v598 = vpop.f32.mrf.mxu0
    %599 = vmatprep.mubr.f32.mxu0 0.0
    %600 = vmatmul.mubr.f32.gmra.mxu0 %v242
    %v601 = vpop.f32.mrf.mxu0
    %v602 = vadd.f32 0.0, %v601
    %v603 = vpop.f32.mrf.mxu0
    %604 = vmatprep.mubr.f32.mxu0 0.0
    %605 = vmatmul.mubr.f32.gmra.mxu0 %v245
    %v606 = vpop.f32.mrf.mxu0
    %v607 = vadd.f32 0.0, %v606
    %v608 = vpop.f32.mrf.mxu0
    %609 = vmatprep.mubr.f32.mxu0 0.0
    %610 = vmatmul.mubr.f32.gmra.mxu0 %v248
    %v611 = vpop.f32.mrf.mxu0
    %v612 = vadd.f32 0.0, %v611
    %v613 = vpop.f32.mrf.mxu0
    %614 = vmatprep.mubr.f32.mxu0 0.0
    %615 = vmatmul.mubr.f32.gmra.mxu0 %v251
    %v616 = vpop.f32.mrf.mxu0
    %v617 = vadd.f32 0.0, %v616
    %v618 = vpop.f32.mrf.mxu0
    %619 = vmatprep.mubr.f32.mxu0 0.0
    %620 = vmatmul.mubr.f32.gmra.mxu0 %v254
    %v621 = vpop.f32.mrf.mxu0
    %v622 = vadd.f32 0.0, %v621
    %v623 = vpop.f32.mrf.mxu0
    %624 = vmatprep.mubr.f32.mxu0 0.0
    %625 = vmatmul.mubr.f32.gmra.mxu0 %v257
    %v626 = vpop.f32.mrf.mxu0
    %v627 = vadd.f32 0.0, %v626
    %v628 = vpop.f32.mrf.mxu0
    %629 = vmatprep.mubr.f32.mxu0 0.0
    %630 = vmatmul.mubr.f32.gmra.mxu0 %v260
    %v631 = vpop.f32.mrf.mxu0
    %v632 = vadd.f32 0.0, %v631
    %v633 = vpop.f32.mrf.mxu0
    %634 = vmatprep.mubr.f32.mxu0 0.0
    %635 = vmatmul.mubr.f32.gmra.mxu0 %v263
    %v636 = vpop.f32.mrf.mxu0
    %v637 = vadd.f32 0.0, %v636
    %v638 = vpop.f32.mrf.mxu0
    %639 = vmatprep.mubr.f32.mxu0 0.0
    %640 = vmatmul.mubr.f32.gmra.mxu0 %v266
    %v641 = vpop.f32.mrf.mxu0
    %v642 = vadd.f32 0.0, %v641
    %v643 = vpop.f32.mrf.mxu0
    %644 = vmatprep.mubr.f32.mxu0 0.0
    %645 = vmatmul.mubr.f32.gmra.mxu0 %v269
    %v646 = vpop.f32.mrf.mxu0
    %v647 = vadd.f32 0.0, %v646
    %v648 = vpop.f32.mrf.mxu0
    %649 = vmatprep.mubr.f32.mxu0 0.0
    %650 = vmatmul.mubr.f32.gmra.mxu0 %v272
    %v651 = vpop.f32.mrf.mxu0
    %v652 = vadd.f32 0.0, %v651
    %v653 = vpop.f32.mrf.mxu0
    %654 = vmatprep.mubr.f32.mxu0 0.0
    %655 = vmatmul.mubr.f32.gmra.mxu0 %v275
    %v656 = vpop.f32.mrf.mxu0
    %v657 = vadd.f32 0.0, %v656
    %v658 = vpop.f32.mrf.mxu0
    %659 = vmatprep.mubr.f32.mxu0 0.0
    %660 = vmatmul.mubr.f32.gmra.mxu0 %v278
    %v661 = vpop.f32.mrf.mxu0
    %v662 = vadd.f32 0.0, %v661
    %v663 = vpop.f32.mrf.mxu0
    %664 = vdwg.mxu0
    %665 = vst [vmem:[#allocation4] sm:$0xff] %v347
    %666 = vst [vmem:[#allocation4 + $0x8] sm:$0xff] %v352
    %667 = vst [vmem:[#allocation4 + $0x10] sm:$0xff] %v357
    %668 = vst [vmem:[#allocation4 + $0x18] sm:$0xff] %v362
    %669 = vst [vmem:[#allocation4 + $0x20] sm:$0xff] %v367
    %670 = vst [vmem:[#allocation4 + $0x28] sm:$0xff] %v372
    %671 = vst [vmem:[#allocation4 + $0x30] sm:$0xff] %v377
    %672 = vst [vmem:[#allocation4 + $0x38] sm:$0xff] %v382
    %673 = vst [vmem:[#allocation4 + $0x40] sm:$0xff] %v387
    %674 = vst [vmem:[#allocation4 + $0x48] sm:$0xff] %v392
    %675 = vst [vmem:[#allocation4 + $0x50] sm:$0xff] %v397
    %676 = vst [vmem:[#allocation4 + $0x58] sm:$0xff] %v402
    %677 = vst [vmem:[#allocation4 + $0x60] sm:$0xff] %v407
    %678 = vst [vmem:[#allocation4 + $0x68] sm:$0xff] %v412
    %679 = vst [vmem:[#allocation4 + $0x70] sm:$0xff] %v417
    %680 = vst [vmem:[#allocation4 + $0x78] sm:$0xff] %v422
    %681 = vst [vmem:[#allocation4 + $0x80] sm:$0xff] %v427
    %682 = vst [vmem:[#allocation4 + $0x88] sm:$0xff] %v432
    %683 = vst [vmem:[#allocation4 + $0x90] sm:$0xff] %v437
    %684 = vst [vmem:[#allocation4 + $0x98] sm:$0xff] %v442
    %685 = vst [vmem:[#allocation4 + $0xa0] sm:$0xff] %v447
    %686 = vst [vmem:[#allocation4 + $0xa8] sm:$0xff] %v452
    %687 = vst [vmem:[#allocation4 + $0xb0] sm:$0xff] %v457
    %688 = vst [vmem:[#allocation4 + $0xb8] sm:$0xff] %v462
    %689 = vst [vmem:[#allocation4 + $0xc0] sm:$0xff] %v467
    %690 = vst [vmem:[#allocation4 + $0xc8] sm:$0xff] %v472
    %691 = vst [vmem:[#allocation4 + $0xd0] sm:$0xff] %v477
    %692 = vst [vmem:[#allocation4 + $0xd8] sm:$0xff] %v482
    %693 = vst [vmem:[#allocation4 + $0xe0] sm:$0xff] %v487
    %694 = vst [vmem:[#allocation4 + $0xe8] sm:$0xff] %v492
    %695 = vst [vmem:[#allocation4 + $0xf0] sm:$0xff] %v497
    %696 = vst [vmem:[#allocation4 + $0xf8] sm:$0xff] %v502
    %697 = vst [vmem:[#allocation4 + $0x100] sm:$0xff] %v507
    %698 = vst [vmem:[#allocation4 + $0x108] sm:$0xff] %v512
    %699 = vst [vmem:[#allocation4 + $0x110] sm:$0xff] %v517
    %700 = vst [vmem:[#allocation4 + $0x118] sm:$0xff] %v522
    %701 = vst [vmem:[#allocation4 + $0x120] sm:$0xff] %v527
    %702 = vst [vmem:[#allocation4 + $0x128] sm:$0xff] %v532
    %703 = vst [vmem:[#allocation4 + $0x130] sm:$0xff] %v537
    %704 = vst [vmem:[#allocation4 + $0x138] sm:$0xff] %v542
    %705 = vst [vmem:[#allocation4 + $0x140] sm:$0xff] %v547
    %706 = vst [vmem:[#allocation4 + $0x148] sm:$0xff] %v552
    %707 = vst [vmem:[#allocation4 + $0x150] sm:$0xff] %v557
    %708 = vst [vmem:[#allocation4 + $0x158] sm:$0xff] %v562
    %709 = vst [vmem:[#allocation4 + $0x160] sm:$0xff] %v567
    %710 = vst [vmem:[#allocation4 + $0x168] sm:$0xff] %v572
    %711 = vst [vmem:[#allocation4 + $0x170] sm:$0xff] %v577
    %712 = vst [vmem:[#allocation4 + $0x178] sm:$0xff] %v582
    %713 = vst [vmem:[#allocation4 + $0x180] sm:$0xff] %v587
    %714 = vst [vmem:[#allocation4 + $0x188] sm:$0xff] %v592
    %715 = vst [vmem:[#allocation4 + $0x190] sm:$0xff] %v597
    %716 = vst [vmem:[#allocation4 + $0x198] sm:$0xff] %v602
    %717 = vst [vmem:[#allocation4 + $0x1a0] sm:$0xff] %v607
    %718 = vst [vmem:[#allocation4 + $0x1a8] sm:$0xff] %v612
    %719 = vst [vmem:[#allocation4 + $0x1b0] sm:$0xff] %v617
    %720 = vst [vmem:[#allocation4 + $0x1b8] sm:$0xff] %v622
    %721 = vst [vmem:[#allocation4 + $0x1c0] sm:$0xff] %v627
    %722 = vst [vmem:[#allocation4 + $0x1c8] sm:$0xff] %v632
    %723 = vst [vmem:[#allocation4 + $0x1d0] sm:$0xff] %v637
    %724 = vst [vmem:[#allocation4 + $0x1d8] sm:$0xff] %v642
    %725 = vst [vmem:[#allocation4 + $0x1e0] sm:$0xff] %v647
    %726 = vst [vmem:[#allocation4 + $0x1e8] sm:$0xff] %v652
    %727 = vst [vmem:[#allocation4 + $0x1f0] sm:$0xff] %v657
    %728 = vst [vmem:[#allocation4 + $0x1f8] sm:$0xff] %v662
    %v729 = vpack.c.bf16 %v352, %v347
    %v730 = vpack.c.bf16 %v362, %v357
    %v731 = vpack.c.bf16 %v372, %v367
    %v732 = vpack.c.bf16 %v382, %v377
    %v733 = vpack.c.bf16 %v392, %v387
    %v734 = vpack.c.bf16 %v402, %v397
    %v735 = vpack.c.bf16 %v412, %v407
    %v736 = vpack.c.bf16 %v422, %v417
    %v737 = vpack.c.bf16 %v432, %v427
    %v738 = vpack.c.bf16 %v442, %v437
    %v739 = vpack.c.bf16 %v452, %v447
    %v740 = vpack.c.bf16 %v462, %v457
    %v741 = vpack.c.bf16 %v472, %v467
    %v742 = vpack.c.bf16 %v482, %v477
    %v743 = vpack.c.bf16 %v492, %v487
    %v744 = vpack.c.bf16 %v502, %v497
    %v745 = vpack.c.bf16 %v512, %v507
    %v746 = vpack.c.bf16 %v522, %v517
    %v747 = vpack.c.bf16 %v532, %v527
    %v748 = vpack.c.bf16 %v542, %v537
    %v749 = vpack.c.bf16 %v552, %v547
    %v750 = vpack.c.bf16 %v562, %v557
    %v751 = vpack.c.bf16 %v572, %v567
    %v752 = vpack.c.bf16 %v582, %v577
    %v753 = vpack.c.bf16 %v592, %v587
    %v754 = vpack.c.bf16 %v602, %v597
    %v755 = vpack.c.bf16 %v612, %v607
    %v756 = vpack.c.bf16 %v622, %v617
    %v757 = vpack.c.bf16 %v632, %v627
    %v758 = vpack.c.bf16 %v642, %v637
    %v759 = vpack.c.bf16 %v652, %v647
    %v760 = vpack.c.bf16 %v662, %v657
    %v793 = vunpack.c.l.b16 %v729
    %v794 = vunpack.c.h.b16 %v729
    %v795 = vunpack.c.l.b16 %v730
    %v796 = vunpack.c.h.b16 %v730
    %v797 = vunpack.c.l.b16 %v731
    %v798 = vunpack.c.h.b16 %v731
    %v799 = vunpack.c.l.b16 %v732
    %v800 = vunpack.c.h.b16 %v732
    %v801 = vunpack.c.l.b16 %v733
    %v802 = vunpack.c.h.b16 %v733
    %v803 = vunpack.c.l.b16 %v734
    %v804 = vunpack.c.h.b16 %v734
    %v805 = vunpack.c.l.b16 %v735
    %v806 = vunpack.c.h.b16 %v735
    %v807 = vunpack.c.l.b16 %v736
    %v808 = vunpack.c.h.b16 %v736
    %v809 = vunpack.c.l.b16 %v737
    %v810 = vunpack.c.h.b16 %v737
    %v811 = vunpack.c.l.b16 %v738
    %v812 = vunpack.c.h.b16 %v738
    %v813 = vunpack.c.l.b16 %v739
    %v814 = vunpack.c.h.b16 %v739
    %v815 = vunpack.c.l.b16 %v740
    %v816 = vunpack.c.h.b16 %v740
    %v817 = vunpack.c.l.b16 %v741
    %v818 = vunpack.c.h.b16 %v741
    %v819 = vunpack.c.l.b16 %v742
    %v820 = vunpack.c.h.b16 %v742
    %v821 = vunpack.c.l.b16 %v743
    %v822 = vunpack.c.h.b16 %v743
    %v823 = vunpack.c.l.b16 %v744
    %v824 = vunpack.c.h.b16 %v744
    %v825 = vunpack.c.l.b16 %v745
    %v826 = vunpack.c.h.b16 %v745
    %v827 = vunpack.c.l.b16 %v746
    %v828 = vunpack.c.h.b16 %v746
    %v829 = vunpack.c.l.b16 %v747
    %v830 = vunpack.c.h.b16 %v747
    %v831 = vunpack.c.l.b16 %v748
    %v832 = vunpack.c.h.b16 %v748
    %v833 = vunpack.c.l.b16 %v749
    %v834 = vunpack.c.h.b16 %v749
    %v835 = vunpack.c.l.b16 %v750
    %v836 = vunpack.c.h.b16 %v750
    %v837 = vunpack.c.l.b16 %v751
    %v838 = vunpack.c.h.b16 %v751
    %v839 = vunpack.c.l.b16 %v752
    %v840 = vunpack.c.h.b16 %v752
    %v841 = vunpack.c.l.b16 %v753
    %v842 = vunpack.c.h.b16 %v753
    %v843 = vunpack.c.l.b16 %v754
    %v844 = vunpack.c.h.b16 %v754
    %v845 = vunpack.c.l.b16 %v755
    %v846 = vunpack.c.h.b16 %v755
    %v847 = vunpack.c.l.b16 %v756
    %v848 = vunpack.c.h.b16 %v756
    %v849 = vunpack.c.l.b16 %v757
    %v850 = vunpack.c.h.b16 %v757
    %v851 = vunpack.c.l.b16 %v758
    %v852 = vunpack.c.h.b16 %v758
    %v853 = vunpack.c.l.b16 %v759
    %v854 = vunpack.c.h.b16 %v759
    %v855 = vunpack.c.l.b16 %v760
    %v856 = vunpack.c.h.b16 %v760
    %v857 = vpack.c.b16 %v793, %v793
    %v858 = vpack.c.b16 %v794, %v794
    %v859 = vpack.c.b16 %v795, %v795
    %v860 = vpack.c.b16 %v796, %v796
    %v861 = vpack.c.b16 %v797, %v797
    %v862 = vpack.c.b16 %v798, %v798
    %v863 = vpack.c.b16 %v799, %v799
    %v864 = vpack.c.b16 %v800, %v800
    %v865 = vpack.c.b16 %v801, %v801
    %v866 = vpack.c.b16 %v802, %v802
    %v867 = vpack.c.b16 %v803, %v803
    %v868 = vpack.c.b16 %v804, %v804
    %v869 = vpack.c.b16 %v805, %v805
    %v870 = vpack.c.b16 %v806, %v806
    %v871 = vpack.c.b16 %v807, %v807
    %v872 = vpack.c.b16 %v808, %v808
    %v873 = vpack.c.b16 %v809, %v809
    %v874 = vpack.c.b16 %v810, %v810
    %v875 = vpack.c.b16 %v811, %v811
    %v876 = vpack.c.b16 %v812, %v812
    %v877 = vpack.c.b16 %v813, %v813
    %v878 = vpack.c.b16 %v814, %v814
    %v879 = vpack.c.b16 %v815, %v815
    %v880 = vpack.c.b16 %v816, %v816
    %v881 = vpack.c.b16 %v817, %v817
    %v882 = vpack.c.b16 %v818, %v818
    %v883 = vpack.c.b16 %v819, %v819
    %v884 = vpack.c.b16 %v820, %v820
    %v885 = vpack.c.b16 %v821, %v821
    %v886 = vpack.c.b16 %v822, %v822
    %v887 = vpack.c.b16 %v823, %v823
    %v888 = vpack.c.b16 %v824, %v824
    %v889 = vpack.c.b16 %v825, %v825
    %v890 = vpack.c.b16 %v826, %v826
    %v891 = vpack.c.b16 %v827, %v827
    %v892 = vpack.c.b16 %v828, %v828
    %v893 = vpack.c.b16 %v829, %v829
    %v894 = vpack.c.b16 %v830, %v830
    %v895 = vpack.c.b16 %v831, %v831
    %v896 = vpack.c.b16 %v832, %v832
    %v897 = vpack.c.b16 %v833, %v833
    %v898 = vpack.c.b16 %v834, %v834
    %v899 = vpack.c.b16 %v835, %v835
    %v900 = vpack.c.b16 %v836, %v836
    %v901 = vpack.c.b16 %v837, %v837
    %v902 = vpack.c.b16 %v838, %v838
    %v903 = vpack.c.b16 %v839, %v839
    %v904 = vpack.c.b16 %v840, %v840
    %v905 = vpack.c.b16 %v841, %v841
    %v906 = vpack.c.b16 %v842, %v842
    %v907 = vpack.c.b16 %v843, %v843
    %v908 = vpack.c.b16 %v844, %v844
    %v909 = vpack.c.b16 %v845, %v845
    %v910 = vpack.c.b16 %v846, %v846
    %v911 = vpack.c.b16 %v847, %v847
    %v912 = vpack.c.b16 %v848, %v848
    %v913 = vpack.c.b16 %v849, %v849
    %v914 = vpack.c.b16 %v850, %v850
    %v915 = vpack.c.b16 %v851, %v851
    %v916 = vpack.c.b16 %v852, %v852
    %v917 = vpack.c.b16 %v853, %v853
    %v918 = vpack.c.b16 %v854, %v854
    %v919 = vpack.c.b16 %v855, %v855
    %v920 = vpack.c.b16 %v856, %v856
    %985 = vst [vmem:[#allocation2] sm:$0xf] %v857
    %986 = vst [vmem:[#allocation2 + $0x4] sm:$0xf] %v858
    %987 = vst [vmem:[#allocation2 + $0x8] sm:$0xf] %v859
    %988 = vst [vmem:[#allocation2 + $0xc] sm:$0xf] %v860
    %989 = vst [vmem:[#allocation2 + $0x10] sm:$0xf] %v861
    %990 = vst [vmem:[#allocation2 + $0x14] sm:$0xf] %v862
    %991 = vst [vmem:[#allocation2 + $0x18] sm:$0xf] %v863
    %992 = vst [vmem:[#allocation2 + $0x1c] sm:$0xf] %v864
    %993 = vst [vmem:[#allocation2 + $0x20] sm:$0xf] %v865
    %994 = vst [vmem:[#allocation2 + $0x24] sm:$0xf] %v866
    %995 = vst [vmem:[#allocation2 + $0x28] sm:$0xf] %v867
    %996 = vst [vmem:[#allocation2 + $0x2c] sm:$0xf] %v868
    %997 = vst [vmem:[#allocation2 + $0x30] sm:$0xf] %v869
    %998 = vst [vmem:[#allocation2 + $0x34] sm:$0xf] %v870
    %999 = vst [vmem:[#allocation2 + $0x38] sm:$0xf] %v871
    %1000 = vst [vmem:[#allocation2 + $0x3c] sm:$0xf] %v872
    %1001 = vst [vmem:[#allocation2 + $0x40] sm:$0xf] %v873
    %1002 = vst [vmem:[#allocation2 + $0x44] sm:$0xf] %v874
    %1003 = vst [vmem:[#allocation2 + $0x48] sm:$0xf] %v875
    %1004 = vst [vmem:[#allocation2 + $0x4c] sm:$0xf] %v876
    %1005 = vst [vmem:[#allocation2 + $0x50] sm:$0xf] %v877
    %1006 = vst [vmem:[#allocation2 + $0x54] sm:$0xf] %v878
    %1007 = vst [vmem:[#allocation2 + $0x58] sm:$0xf] %v879
    %1008 = vst [vmem:[#allocation2 + $0x5c] sm:$0xf] %v880
    %1009 = vst [vmem:[#allocation2 + $0x60] sm:$0xf] %v881
    %1010 = vst [vmem:[#allocation2 + $0x64] sm:$0xf] %v882
    %1011 = vst [vmem:[#allocation2 + $0x68] sm:$0xf] %v883
    %1012 = vst [vmem:[#allocation2 + $0x6c] sm:$0xf] %v884
    %1013 = vst [vmem:[#allocation2 + $0x70] sm:$0xf] %v885
    %1014 = vst [vmem:[#allocation2 + $0x74] sm:$0xf] %v886
    %1015 = vst [vmem:[#allocation2 + $0x78] sm:$0xf] %v887
    %1016 = vst [vmem:[#allocation2 + $0x7c] sm:$0xf] %v888
    %1017 = vst [vmem:[#allocation2 + $0x80] sm:$0xf] %v889
    %1018 = vst [vmem:[#allocation2 + $0x84] sm:$0xf] %v890
    %1019 = vst [vmem:[#allocation2 + $0x88] sm:$0xf] %v891
    %1020 = vst [vmem:[#allocation2 + $0x8c] sm:$0xf] %v892
    %1021 = vst [vmem:[#allocation2 + $0x90] sm:$0xf] %v893
    %1022 = vst [vmem:[#allocation2 + $0x94] sm:$0xf] %v894
    %1023 = vst [vmem:[#allocation2 + $0x98] sm:$0xf] %v895
    %1024 = vst [vmem:[#allocation2 + $0x9c] sm:$0xf] %v896
    %1025 = vst [vmem:[#allocation2 + $0xa0] sm:$0xf] %v897
    %1026 = vst [vmem:[#allocation2 + $0xa4] sm:$0xf] %v898
    %1027 = vst [vmem:[#allocation2 + $0xa8] sm:$0xf] %v899
    %1028 = vst [vmem:[#allocation2 + $0xac] sm:$0xf] %v900
    %1029 = vst [vmem:[#allocation2 + $0xb0] sm:$0xf] %v901
    %1030 = vst [vmem:[#allocation2 + $0xb4] sm:$0xf] %v902
    %1031 = vst [vmem:[#allocation2 + $0xb8] sm:$0xf] %v903
    %1032 = vst [vmem:[#allocation2 + $0xbc] sm:$0xf] %v904
    %1033 = vst [vmem:[#allocation2 + $0xc0] sm:$0xf] %v905
    %1034 = vst [vmem:[#allocation2 + $0xc4] sm:$0xf] %v906
    %1035 = vst [vmem:[#allocation2 + $0xc8] sm:$0xf] %v907
    %1036 = vst [vmem:[#allocation2 + $0xcc] sm:$0xf] %v908
    %1037 = vst [vmem:[#allocation2 + $0xd0] sm:$0xf] %v909
    %1038 = vst [vmem:[#allocation2 + $0xd4] sm:$0xf] %v910
    %1039 = vst [vmem:[#allocation2 + $0xd8] sm:$0xf] %v911
    %1040 = vst [vmem:[#allocation2 + $0xdc] sm:$0xf] %v912
    %1041 = vst [vmem:[#allocation2 + $0xe0] sm:$0xf] %v913
    %1042 = vst [vmem:[#allocation2 + $0xe4] sm:$0xf] %v914
    %1043 = vst [vmem:[#allocation2 + $0xe8] sm:$0xf] %v915
    %1044 = vst [vmem:[#allocation2 + $0xec] sm:$0xf] %v916
    %1045 = vst [vmem:[#allocation2 + $0xf0] sm:$0xf] %v917
    %1046 = vst [vmem:[#allocation2 + $0xf4] sm:$0xf] %v918
    %1047 = vst [vmem:[#allocation2 + $0xf8] sm:$0xf] %v919
    %1048 = vst [vmem:[#allocation2 + $0xfc] sm:$0xf] %v920
    // Predicated region
    $region10: #{tpu_custom_call.1} parent=1 // pred_check
      _
    $region11: #{tpu_custom_call.1} parent=1 // pred_check_branch
      %1050 = sbr.rel (0) target = $region13
    $region12: #{tpu_custom_call.1} parent=1 // pred_region
      %s1052 = ssub.s32 4096, 4096
      %1053 = vsyncadd [#allocation3], %s1052
      %s1054 = sshll.u32 [#allocation2], 4
      %s1055 = int_to_ptr.vmem [resolvable:$true] %s1054
      %1060 = dma.vmem_to_hbm [thread:$0]  %s1055, 4096, %s2, [#allocation3], 64, 64, 4
    $region13: #{tpu_custom_call.1} parent=1 // pred_fallthru
      _
    // Predicated region
    $region14: #{tpu_custom_call.1} parent=1 // pred_check
      _
    $region15: #{tpu_custom_call.1} parent=1 // pred_check_branch
      %1062 = sbr.rel (0) target = $region17
    $region16: #{tpu_custom_call.1} parent=1 // pred_region
      %s1064 = ssub.s32 8192, 8192
      %1065 = vsyncadd [#allocation5], %s1064
      %s1066 = sshll.u32 [#allocation4], 4
      %s1067 = int_to_ptr.vmem [resolvable:$true] %s1066
      %1072 = dma.vmem_to_hbm [thread:$0]  %s1067, 8192, %s3, [#allocation5], 128, 128, 8
    $region17: #{tpu_custom_call.1} parent=1 // pred_fallthru
      _
    // Predicated region
    $region18: #{tpu_custom_call.1} parent=1 // pred_check
      _
    $region19: #{tpu_custom_call.1} parent=1 // pred_check_branch
      %1074 = sbr.rel (0) target = $region21
    $region20: #{tpu_custom_call.1} parent=1 // pred_region
      %1075 = dma.done [#allocation3], 4096
    $region21: #{tpu_custom_call.1} parent=1 // pred_fallthru
      _
    // Predicated region
    $region22: #{tpu_custom_call.1} parent=1 // pred_check
      _
    $region23: #{tpu_custom_call.1} parent=1 // pred_check_branch
      %1077 = sbr.rel (0) target = $region25
    $region24: #{tpu_custom_call.1} parent=1 // pred_region
      %1078 = dma.done [#allocation5], 8192
    $region25: #{tpu_custom_call.1} parent=1 // pred_fallthru
      _
    %1079 = vsyncpa [#allocation3], 1
    %1080 = vsyncpa [#allocation5], 1

</llo_original>
